<compile_context>
chip_gen: v6e
topology: v6e:2x2x1
jax: 0.10.0
libtpu: 0.0.40
codegen_flags: <defaults>
</compile_context>

<pallas_src>
import functools
import math

import jax
import jax.numpy as jnp
from jax.experimental import pallas as pl
from jax.experimental.pallas import tpu as pltpu

IN_DIM = 4        # x features
LATENT = 2        # latent size
OUT_DIM = 8       # two 4-wide quantile heads
EPSILON = 1e-5    # forward() default epsilon
BETA = 0.28       # hard-coded in the reference: elbo = -log_px - 0.28*kl
LANE = 128
SUBLANE = 8
MAX_TILE_ROWS = 128   # 128 rows * 128 lanes = 16384 samples per grid step


def _vae_kernel(x_ref, noise_ref,
                w_mu_ref, b_mu_ref,
                w_var_ref, b_var_ref,
                w_dec_ref, b_dec_ref,
                xmu_ref, z_ref, zmu_ref, zvar_ref, sums_ref,
                *, n_valid):
    """One batch tile.  Batch occupies (sublane, lane) = (rows, 128); the tiny
    feature dims live on the leading (untiled) axis, so all math runs on fully
    dense (rows, 128) slabs and all stores are lane-dense."""
    tile_rows = x_ref.shape[1]
    slab = (tile_rows, LANE)
    log2pi = jnp.float32(math.log(2.0 * math.pi))

    # Load the four feature slabs once.
    x_rows = [x_ref[k] for k in range(IN_DIM)]            # each (rows, 128)

    # ---- encoder + reparameterized sample + Gaussian log-probs ------------
    # K=4 / K=2 contractions as unrolled VPU broadcast-FMAs (weights are SMEM
    # scalars) -- the MXU would be ~0.1% utilized for these shapes.
    z_rows = []
    log_q = jnp.zeros(slab, jnp.float32)
    log_p = jnp.zeros(slab, jnp.float32)
    for l in range(LATENT):
        z_mu = x_rows[0] * w_mu_ref[0, l]
        pre = x_rows[0] * w_var_ref[0, l]
        for k in range(1, IN_DIM):
            z_mu = z_mu + x_rows[k] * w_mu_ref[k, l]
            pre = pre + x_rows[k] * w_var_ref[k, l]
        z_mu = z_mu + b_mu_ref[l]
        pre = pre + b_var_ref[l]

        # TODO(synk): enc_var is abstract in the reference base class; Softplus
        # is used so the variance is non-negative and .sqrt() is well defined.
        z_var = jax.nn.softplus(pre)
        sigma = jnp.sqrt(z_var) + EPSILON                 # Normal scale
        eps = noise_ref[l]                                # N(0,1) rsample noise
        z = z_mu + sigma * eps                            # q_dist.rsample()

        zmu_ref[l] = z_mu
        zvar_ref[l] = z_var
        z_ref[l] = z
        z_rows.append(z)

        # q = Normal(z_mu, sigma); note (z - z_mu)/sigma == eps.
        log_q = log_q - jnp.log(sigma) - 0.5 * log2pi - 0.5 * jnp.square(eps)
        # prior = Normal(0, 1)
        log_p = log_p - 0.5 * log2pi - 0.5 * jnp.square(z)

    kl = log_q - log_p                                    # (rows, 128)

    # ---- decoder + pinball (quantile) reconstruction -----------------------
    lp_q1 = jnp.zeros(slab, jnp.float32)
    lp_q2 = jnp.zeros(slab, jnp.float32)
    for o in range(OUT_DIM):
        x_mu = (z_rows[0] * w_dec_ref[0, o]
                + z_rows[1] * w_dec_ref[1, o]
                + b_dec_ref[o])
        xmu_ref[o] = x_mu
        d = x_rows[o % IN_DIM] - x_mu
        if o < IN_DIM:      # quantile 0.15 head
            lp_q1 = lp_q1 + jnp.maximum(0.15 * d, (0.15 - 1.0) * d)
        else:               # quantile 0.50 head
            lp_q2 = lp_q2 + jnp.maximum(0.5 * d, (0.5 - 1.0) * d)
    log_px = 0.5 * (lp_q1 + lp_q2)
    elbo = -log_px - BETA * kl

    # ---- masked per-tile partial sums for the batch means ------------------
    row = jax.lax.broadcasted_iota(jnp.int32, slab, 0)
    col = jax.lax.broadcasted_iota(jnp.int32, slab, 1)
    gidx = (pl.program_id(0) * tile_rows + row) * LANE + col
    valid = gidx < n_valid
    s_logpx = jnp.sum(jnp.where(valid, log_px, 0.0))
    s_kl = jnp.sum(jnp.where(valid, kl, 0.0))
    s_elbo = jnp.sum(jnp.where(valid, elbo, 0.0))

    sel = jax.lax.broadcasted_iota(jnp.int32, (SUBLANE, LANE), 0)
    sums_ref[0] = jnp.where(sel == 0, s_logpx,
                  jnp.where(sel == 1, s_kl,
                  jnp.where(sel == 2, s_elbo, 0.0)))


def _pack_batch(a, n_pad):
    """(N, F) -> (F, n_pad // 128, 128), zero-padded on the batch axis."""
    n, f = a.shape
    at = jnp.pad(a.T, ((0, 0), (0, n_pad - n)))
    return at.reshape(f, n_pad // LANE, LANE)


def _unpack_batch(a3, n):
    """(F, R, 128) -> (N, F)."""
    f = a3.shape[0]
    return a3.reshape(f, -1)[:, :n].T


@functools.partial(jax.jit, static_argnames=("max_tile_rows",))
def basemodel_forward(x, noise, params, *, max_tile_rows=MAX_TILE_ROWS):
    """Returns (elbo.mean(), log_px.mean(), kl.mean(), x_mu, z, z_mu, z_var),
    matching the PyTorch basemodel.forward (noise supplies the rsample RNG)."""
    n = x.shape[0]
    w_mu, b_mu, w_var, b_var, w_dec, b_dec = params

    # Choose the batch tile: tile_rows sublane-rows of 128 samples each.
    rows_needed = -(-n // LANE)
    rows_needed = ((rows_needed + SUBLANE - 1) // SUBLANE) * SUBLANE
    tile_rows = min(max_tile_rows, max(SUBLANE, rows_needed))
    tile_n = tile_rows * LANE
    num_tiles = -(-n // tile_n)
    n_pad = num_tiles * tile_n
    r_pad = n_pad // LANE

    x3 = _pack_batch(x.astype(jnp.float32), n_pad)           # (4, r_pad, 128)
    noise3 = _pack_batch(noise.astype(jnp.float32), n_pad)   # (2, r_pad, 128)

    def data_spec(f):
        return pl.BlockSpec((f, tile_rows, LANE), lambda i: (0, i, 0))

    smem_spec = pl.BlockSpec(memory_space=pltpu.MemorySpace.SMEM)

    out_shapes = (
        jax.ShapeDtypeStruct((OUT_DIM, r_pad, LANE), jnp.float32),   # x_mu (packed)
        jax.ShapeDtypeStruct((LATENT, r_pad, LANE), jnp.float32),    # z
        jax.ShapeDtypeStruct((LATENT, r_pad, LANE), jnp.float32),    # z_mu
        jax.ShapeDtypeStruct((LATENT, r_pad, LANE), jnp.float32),    # z_var
        jax.ShapeDtypeStruct((num_tiles, SUBLANE, LANE), jnp.float32),  # partial sums
    )
    out_specs = (
        data_spec(OUT_DIM), data_spec(LATENT), data_spec(LATENT), data_spec(LATENT),
        pl.BlockSpec((1, SUBLANE, LANE), lambda i: (i, 0, 0)),
    )

    kernel = functools.partial(_vae_kernel, n_valid=n)

    xmu3, z3, zmu3, zvar3, sums = pl.pallas_call(
        kernel,
        out_shape=out_shapes,
        grid=(num_tiles,),
        in_specs=[
            data_spec(IN_DIM),       # x, batch-packed
            data_spec(LATENT),       # noise, batch-packed
            smem_spec, smem_spec,    # enc_mu  W, b   (tiny -> SMEM, resident)
            smem_spec, smem_spec,    # enc_var W, b
            smem_spec, smem_spec,    # dec_mu  W, b
        ],
        out_specs=out_specs,
        compiler_params=pltpu.CompilerParams(
            dimension_semantics=("parallel",)),
    )(x3, noise3, w_mu, b_mu, w_var, b_var, w_dec, b_dec)

    x_mu = _unpack_batch(xmu3, n)
    z = _unpack_batch(z3, n)
    z_mu = _unpack_batch(zmu3, n)
    z_var = _unpack_batch(zvar3, n)

    inv_n = jnp.float32(1.0 / n)
    log_px_mean = jnp.sum(sums[:, 0, 0]) * inv_n
    kl_mean = jnp.sum(sums[:, 1, 0]) * inv_n
    elbo_mean = jnp.sum(sums[:, 2, 0]) * inv_n

    return elbo_mean, log_px_mean, kl_mean, x_mu, z, z_mu, z_var


def _reference_forward(x, noise, params):
    """Pure-JAX reference mirroring the PyTorch forward (for verification)."""
    w_mu, b_mu, w_var, b_var, w_dec, b_dec = params
    z_mu = x @ w_mu + b_mu
    z_var = jax.nn.softplus(x @ w_var + b_var)
    sigma = jnp.sqrt(z_var) + EPSILON
    z = z_mu + sigma * noise
    x_mu = z @ w_dec + b_dec
    d1 = x - x_mu[:, 0:4]
    d2 = x - x_mu[:, 4:8]
    log_px = 0.5 * (jnp.sum(jnp.maximum(0.15 * d1, (0.15 - 1.0) * d1), axis=1)
                    + jnp.sum(jnp.maximum(0.5 * d2, (0.5 - 1.0) * d2), axis=1))
    log2pi = math.log(2.0 * math.pi)
    log_q = jnp.sum(-jnp.log(sigma) - 0.5 * log2pi
                    - 0.5 * jnp.square((z - z_mu) / sigma), axis=1)
    log_p = jnp.sum(-0.5 * log2pi - 0.5 * jnp.square(z), axis=1)
    kl = log_q - log_p
    elbo = -log_px - BETA * kl
    return elbo.mean(), log_px.mean(), kl.mean(), x_mu, z, z_mu, z_var


def init_params(key):
    """PyTorch-Linear-style init: U(-1/sqrt(fan_in), 1/sqrt(fan_in))."""
    ks = jax.random.split(key, 6)

    def lin(kw, kb, fan_in, fan_out):
        bound = 1.0 / math.sqrt(float(fan_in))
        w = jax.random.uniform(kw, (fan_in, fan_out), jnp.float32, -bound, bound)
        b = jax.random.uniform(kb, (fan_out,), jnp.float32, -bound, bound)
        return w, b

    w_mu, b_mu = lin(ks[0], ks[1], IN_DIM, LATENT)      # enc_mu
    w_var, b_var = lin(ks[2], ks[3], IN_DIM, LATENT)    # enc_var (pre-softplus)
    w_dec, b_dec = lin(ks[4], ks[5], LATENT, OUT_DIM)   # dec_mu
    return (w_mu, b_mu, w_var, b_var, w_dec, b_dec)


if __name__ == "__main__":
    key = jax.random.PRNGKey(0)
    k_x, k_noise, k_p, k_x2, k_n2 = jax.random.split(key, 5)
    params = init_params(k_p)

    # Small case matching the module (batch=8, features=4, latent=2).
    N = 8
    x = jax.random.normal(k_x, (N, IN_DIM), jnp.float32)
    noise = jax.random.normal(k_noise, (N, LATENT), jnp.float32)
    outs = jax.block_until_ready(basemodel_forward(x, noise, params))
    refs = _reference_forward(x, noise, params)

    elbo_m, logpx_m, kl_m, x_mu, z, z_mu, z_var = outs
    assert x_mu.shape == (N, OUT_DIM) and z.shape == (N, LATENT)
    assert z_mu.shape == (N, LATENT) and z_var.shape == (N, LATENT)
    assert elbo_m.shape == () and logpx_m.shape == () and kl_m.shape == ()
    for got, want in zip(outs, refs):
        assert bool(jnp.all(jnp.isfinite(got)))
        assert bool(jnp.allclose(got, want, rtol=1e-3, atol=1e-3))

    # Ragged, multi-tile case (exercises the tiled grid + batch masking).
    N2 = 2500
    x2 = jax.random.normal(k_x2, (N2, IN_DIM), jnp.float32)
    noise2 = jax.random.normal(k_n2, (N2, LATENT), jnp.float32)
    outs2 = jax.block_until_ready(
        basemodel_forward(x2, noise2, params, max_tile_rows=8))
    refs2 = _reference_forward(x2, noise2, params)
    for got, want in zip(outs2, refs2):
        assert bool(jnp.all(jnp.isfinite(got)))
        assert bool(jnp.allclose(got, want, rtol=1e-3, atol=1e-3))

    print("KERNEL_OK")
</pallas_src>

<mosaic_0001>
module attributes {stable_mosaic.version = 11 : i64} {
  func.func @_vae_kernel(%arg0: i32, %arg1: memref<4x8x128xf32, #tpu.memory_space<vmem>>, %arg2: memref<2x8x128xf32, #tpu.memory_space<vmem>>, %arg3: memref<4x2xf32, #tpu.memory_space<smem>>, %arg4: memref<2xf32, #tpu.memory_space<smem>>, %arg5: memref<4x2xf32, #tpu.memory_space<smem>>, %arg6: memref<2xf32, #tpu.memory_space<smem>>, %arg7: memref<2x8xf32, #tpu.memory_space<smem>>, %arg8: memref<8xf32, #tpu.memory_space<smem>>, %arg9: memref<8x8x128xf32, #tpu.memory_space<vmem>>, %arg10: memref<2x8x128xf32, #tpu.memory_space<vmem>>, %arg11: memref<2x8x128xf32, #tpu.memory_space<vmem>>, %arg12: memref<2x8x128xf32, #tpu.memory_space<vmem>>, %arg13: memref<1x8x128xf32, #tpu.memory_space<vmem>>) attributes {dimension_semantics = [#tpu.dimension_semantics<parallel>], iteration_bounds = array<i64: 1>, scalar_prefetch = 0 : i64, scratch_operands = 0 : i64, tpu.core_type = #tpu.core_type<tc>, window_params = [{transform_indices = @transform_0, window_bounds = array<i64: 4, 8, 128>}, {transform_indices = @transform_1, window_bounds = array<i64: 2, 8, 128>}, {transform_indices = @transform_2, window_bounds = array<i64: 4, 2>}, {transform_indices = @transform_3, window_bounds = array<i64: 2>}, {transform_indices = @transform_4, window_bounds = array<i64: 4, 2>}, {transform_indices = @transform_5, window_bounds = array<i64: 2>}, {transform_indices = @transform_6, window_bounds = array<i64: 2, 8>}, {transform_indices = @transform_7, window_bounds = array<i64: 8>}, {transform_indices = @transform_8, window_bounds = array<i64: 8, 8, 128>}, {transform_indices = @transform_9, window_bounds = array<i64: 2, 8, 128>}, {transform_indices = @transform_10, window_bounds = array<i64: 2, 8, 128>}, {transform_indices = @transform_11, window_bounds = array<i64: 2, 8, 128>}, {transform_indices = @transform_12, window_bounds = array<i64: 1, 8, 128>}]} {
    %c0 = arith.constant 0 : index
    %c0_0 = arith.constant 0 : index
    %c0_1 = arith.constant 0 : index
    %0 = vector.load %arg1[%c0, %c0_0, %c0_1] : memref<4x8x128xf32, #tpu.memory_space<vmem>>, vector<1x8x128xf32>
    %1 = vector.shape_cast %0 : vector<1x8x128xf32> to vector<8x128xf32>
    %c1 = arith.constant 1 : index
    %c0_2 = arith.constant 0 : index
    %c0_3 = arith.constant 0 : index
    %2 = vector.load %arg1[%c1, %c0_2, %c0_3] : memref<4x8x128xf32, #tpu.memory_space<vmem>>, vector<1x8x128xf32>
    %3 = vector.shape_cast %2 : vector<1x8x128xf32> to vector<8x128xf32>
    %c2 = arith.constant 2 : index
    %c0_4 = arith.constant 0 : index
    %c0_5 = arith.constant 0 : index
    %4 = vector.load %arg1[%c2, %c0_4, %c0_5] : memref<4x8x128xf32, #tpu.memory_space<vmem>>, vector<1x8x128xf32>
    %5 = vector.shape_cast %4 : vector<1x8x128xf32> to vector<8x128xf32>
    %c3 = arith.constant 3 : index
    %c0_6 = arith.constant 0 : index
    %c0_7 = arith.constant 0 : index
    %6 = vector.load %arg1[%c3, %c0_6, %c0_7] : memref<4x8x128xf32, #tpu.memory_space<vmem>>, vector<1x8x128xf32>
    %7 = vector.shape_cast %6 : vector<1x8x128xf32> to vector<8x128xf32>
    %cst = arith.constant 0.000000e+00 : f32
    %8 = vector.broadcast %cst : f32 to vector<8x128xf32>
    %cst_8 = arith.constant 0.000000e+00 : f32
    %9 = vector.broadcast %cst_8 : f32 to vector<8x128xf32>
    %c0_9 = arith.constant 0 : index
    %c0_10 = arith.constant 0 : index
    %10 = memref.load %arg3[%c0_9, %c0_10] : memref<4x2xf32, #tpu.memory_space<smem>>
    %11 = vector.broadcast %10 : f32 to vector<8x128xf32>
    %12 = arith.mulf %1, %11 : vector<8x128xf32>
    %c0_11 = arith.constant 0 : index
    %c0_12 = arith.constant 0 : index
    %13 = memref.load %arg5[%c0_11, %c0_12] : memref<4x2xf32, #tpu.memory_space<smem>>
    %14 = vector.broadcast %13 : f32 to vector<8x128xf32>
    %15 = arith.mulf %1, %14 : vector<8x128xf32>
    %c1_13 = arith.constant 1 : index
    %c0_14 = arith.constant 0 : index
    %16 = memref.load %arg3[%c1_13, %c0_14] : memref<4x2xf32, #tpu.memory_space<smem>>
    %17 = vector.broadcast %16 : f32 to vector<8x128xf32>
    %18 = arith.mulf %3, %17 : vector<8x128xf32>
    %19 = arith.addf %12, %18 : vector<8x128xf32>
    %c1_15 = arith.constant 1 : index
    %c0_16 = arith.constant 0 : index
    %20 = memref.load %arg5[%c1_15, %c0_16] : memref<4x2xf32, #tpu.memory_space<smem>>
    %21 = vector.broadcast %20 : f32 to vector<8x128xf32>
    %22 = arith.mulf %3, %21 : vector<8x128xf32>
    %23 = arith.addf %15, %22 : vector<8x128xf32>
    %c2_17 = arith.constant 2 : index
    %c0_18 = arith.constant 0 : index
    %24 = memref.load %arg3[%c2_17, %c0_18] : memref<4x2xf32, #tpu.memory_space<smem>>
    %25 = vector.broadcast %24 : f32 to vector<8x128xf32>
    %26 = arith.mulf %5, %25 : vector<8x128xf32>
    %27 = arith.addf %19, %26 : vector<8x128xf32>
    %c2_19 = arith.constant 2 : index
    %c0_20 = arith.constant 0 : index
    %28 = memref.load %arg5[%c2_19, %c0_20] : memref<4x2xf32, #tpu.memory_space<smem>>
    %29 = vector.broadcast %28 : f32 to vector<8x128xf32>
    %30 = arith.mulf %5, %29 : vector<8x128xf32>
    %31 = arith.addf %23, %30 : vector<8x128xf32>
    %c3_21 = arith.constant 3 : index
    %c0_22 = arith.constant 0 : index
    %32 = memref.load %arg3[%c3_21, %c0_22] : memref<4x2xf32, #tpu.memory_space<smem>>
    %33 = vector.broadcast %32 : f32 to vector<8x128xf32>
    %34 = arith.mulf %7, %33 : vector<8x128xf32>
    %35 = arith.addf %27, %34 : vector<8x128xf32>
    %c3_23 = arith.constant 3 : index
    %c0_24 = arith.constant 0 : index
    %36 = memref.load %arg5[%c3_23, %c0_24] : memref<4x2xf32, #tpu.memory_space<smem>>
    %37 = vector.broadcast %36 : f32 to vector<8x128xf32>
    %38 = arith.mulf %7, %37 : vector<8x128xf32>
    %39 = arith.addf %31, %38 : vector<8x128xf32>
    %c0_25 = arith.constant 0 : index
    %40 = memref.load %arg4[%c0_25] : memref<2xf32, #tpu.memory_space<smem>>
    %41 = vector.broadcast %40 : f32 to vector<8x128xf32>
    %42 = arith.addf %35, %41 : vector<8x128xf32>
    %c0_26 = arith.constant 0 : index
    %43 = memref.load %arg6[%c0_26] : memref<2xf32, #tpu.memory_space<smem>>
    %44 = vector.broadcast %43 : f32 to vector<8x128xf32>
    %45 = arith.addf %39, %44 : vector<8x128xf32>
    %cst_27 = arith.constant 0.000000e+00 : f32
    %46 = vector.broadcast %cst_27 : f32 to vector<8x128xf32>
    %47 = arith.maximumf %45, %46 : vector<8x128xf32>
    %48 = vector.broadcast %cst_27 : f32 to vector<8x128xf32>
    %49 = arith.subf %45, %48 : vector<8x128xf32>
    %50 = arith.cmpf one, %49, %49 : vector<8x128xf32>
    %51 = vector.broadcast %cst_27 : f32 to vector<8x128xf32>
    %52 = arith.addf %45, %51 : vector<8x128xf32>
    %53 = math.absf %49 : vector<8x128xf32>
    %cst_28 = arith.constant 0.000000e+00 : f32
    %54 = vector.broadcast %cst_28 : f32 to vector<8x128xf32>
    %55 = arith.subf %54, %53 : vector<8x128xf32>
    %56 = math.exp %55 : vector<8x128xf32>
    %57 = math.log1p %56 : vector<8x128xf32>
    %58 = arith.addf %47, %57 : vector<8x128xf32>
    %59 = arith.select %50, %52, %58 : vector<8x128xi1>, vector<8x128xf32>
    %60 = math.sqrt %59 : vector<8x128xf32>
    %cst_29 = arith.constant 9.99999974E-6 : f32
    %61 = vector.broadcast %cst_29 : f32 to vector<8x128xf32>
    %62 = arith.addf %60, %61 : vector<8x128xf32>
    %c0_30 = arith.constant 0 : index
    %c0_31 = arith.constant 0 : index
    %c0_32 = arith.constant 0 : index
    %63 = vector.load %arg2[%c0_30, %c0_31, %c0_32] : memref<2x8x128xf32, #tpu.memory_space<vmem>>, vector<1x8x128xf32>
    %64 = vector.shape_cast %63 : vector<1x8x128xf32> to vector<8x128xf32>
    %65 = arith.mulf %62, %64 : vector<8x128xf32>
    %66 = arith.addf %42, %65 : vector<8x128xf32>
    %c0_33 = arith.constant 0 : index
    %c0_34 = arith.constant 0 : index
    %c0_35 = arith.constant 0 : index
    %67 = vector.load %arg11[%c0_33, %c0_34, %c0_35] : memref<2x8x128xf32, #tpu.memory_space<vmem>>, vector<1x8x128xf32>
    %68 = vector.shape_cast %67 : vector<1x8x128xf32> to vector<8x128xf32>
    %69 = vector.shape_cast %42 : vector<8x128xf32> to vector<1x8x128xf32>
    tpu.vector_store %arg11[%c0_33, %c0_34, %c0_35], %69 {strides = array<i32>} : memref<2x8x128xf32, #tpu.memory_space<vmem>>, vector<1x8x128xf32>,
    %c0_36 = arith.constant 0 : index
    %c0_37 = arith.constant 0 : index
    %c0_38 = arith.constant 0 : index
    %70 = vector.load %arg12[%c0_36, %c0_37, %c0_38] : memref<2x8x128xf32, #tpu.memory_space<vmem>>, vector<1x8x128xf32>
    %71 = vector.shape_cast %70 : vector<1x8x128xf32> to vector<8x128xf32>
    %72 = vector.shape_cast %59 : vector<8x128xf32> to vector<1x8x128xf32>
    tpu.vector_store %arg12[%c0_36, %c0_37, %c0_38], %72 {strides = array<i32>} : memref<2x8x128xf32, #tpu.memory_space<vmem>>, vector<1x8x128xf32>,
    %c0_39 = arith.constant 0 : index
    %c0_40 = arith.constant 0 : index
    %c0_41 = arith.constant 0 : index
    %73 = vector.load %arg10[%c0_39, %c0_40, %c0_41] : memref<2x8x128xf32, #tpu.memory_space<vmem>>, vector<1x8x128xf32>
    %74 = vector.shape_cast %73 : vector<1x8x128xf32> to vector<8x128xf32>
    %75 = vector.shape_cast %66 : vector<8x128xf32> to vector<1x8x128xf32>
    tpu.vector_store %arg10[%c0_39, %c0_40, %c0_41], %75 {strides = array<i32>} : memref<2x8x128xf32, #tpu.memory_space<vmem>>, vector<1x8x128xf32>,
    %76 = math.log %62 : vector<8x128xf32>
    %77 = arith.subf %8, %76 : vector<8x128xf32>
    %cst_42 = arith.constant 5.000000e-01 : f32
    %cst_43 = arith.constant 1.83787704 : f32
    %78 = arith.mulf %cst_42, %cst_43 : f32
    %79 = vector.broadcast %78 : f32 to vector<8x128xf32>
    %80 = arith.subf %77, %79 : vector<8x128xf32>
    %81 = arith.mulf %64, %64 : vector<8x128xf32>
    %cst_44 = arith.constant 5.000000e-01 : f32
    %82 = vector.broadcast %cst_44 : f32 to vector<8x128xf32>
    %83 = arith.mulf %82, %81 : vector<8x128xf32>
    %84 = arith.subf %80, %83 : vector<8x128xf32>
    %cst_45 = arith.constant 5.000000e-01 : f32
    %cst_46 = arith.constant 1.83787704 : f32
    %85 = arith.mulf %cst_45, %cst_46 : f32
    %86 = vector.broadcast %85 : f32 to vector<8x128xf32>
    %87 = arith.subf %9, %86 : vector<8x128xf32>
    %88 = arith.mulf %66, %66 : vector<8x128xf32>
    %cst_47 = arith.constant 5.000000e-01 : f32
    %89 = vector.broadcast %cst_47 : f32 to vector<8x128xf32>
    %90 = arith.mulf %89, %88 : vector<8x128xf32>
    %91 = arith.subf %87, %90 : vector<8x128xf32>
    %c0_48 = arith.constant 0 : index
    %c1_49 = arith.constant 1 : index
    %92 = memref.load %arg3[%c0_48, %c1_49] : memref<4x2xf32, #tpu.memory_space<smem>>
    %93 = vector.broadcast %92 : f32 to vector<8x128xf32>
    %94 = arith.mulf %1, %93 : vector<8x128xf32>
    %c0_50 = arith.constant 0 : index
    %c1_51 = arith.constant 1 : index
    %95 = memref.load %arg5[%c0_50, %c1_51] : memref<4x2xf32, #tpu.memory_space<smem>>
    %96 = vector.broadcast %95 : f32 to vector<8x128xf32>
    %97 = arith.mulf %1, %96 : vector<8x128xf32>
    %c1_52 = arith.constant 1 : index
    %c1_53 = arith.constant 1 : index
    %98 = memref.load %arg3[%c1_52, %c1_53] : memref<4x2xf32, #tpu.memory_space<smem>>
    %99 = vector.broadcast %98 : f32 to vector<8x128xf32>
    %100 = arith.mulf %3, %99 : vector<8x128xf32>
    %101 = arith.addf %94, %100 : vector<8x128xf32>
    %c1_54 = arith.constant 1 : index
    %c1_55 = arith.constant 1 : index
    %102 = memref.load %arg5[%c1_54, %c1_55] : memref<4x2xf32, #tpu.memory_space<smem>>
    %103 = vector.broadcast %102 : f32 to vector<8x128xf32>
    %104 = arith.mulf %3, %103 : vector<8x128xf32>
    %105 = arith.addf %97, %104 : vector<8x128xf32>
    %c2_56 = arith.constant 2 : index
    %c1_57 = arith.constant 1 : index
    %106 = memref.load %arg3[%c2_56, %c1_57] : memref<4x2xf32, #tpu.memory_space<smem>>
    %107 = vector.broadcast %106 : f32 to vector<8x128xf32>
    %108 = arith.mulf %5, %107 : vector<8x128xf32>
    %109 = arith.addf %101, %108 : vector<8x128xf32>
    %c2_58 = arith.constant 2 : index
    %c1_59 = arith.constant 1 : index
    %110 = memref.load %arg5[%c2_58, %c1_59] : memref<4x2xf32, #tpu.memory_space<smem>>
    %111 = vector.broadcast %110 : f32 to vector<8x128xf32>
    %112 = arith.mulf %5, %111 : vector<8x128xf32>
    %113 = arith.addf %105, %112 : vector<8x128xf32>
    %c3_60 = arith.constant 3 : index
    %c1_61 = arith.constant 1 : index
    %114 = memref.load %arg3[%c3_60, %c1_61] : memref<4x2xf32, #tpu.memory_space<smem>>
    %115 = vector.broadcast %114 : f32 to vector<8x128xf32>
    %116 = arith.mulf %7, %115 : vector<8x128xf32>
    %117 = arith.addf %109, %116 : vector<8x128xf32>
    %c3_62 = arith.constant 3 : index
    %c1_63 = arith.constant 1 : index
    %118 = memref.load %arg5[%c3_62, %c1_63] : memref<4x2xf32, #tpu.memory_space<smem>>
    %119 = vector.broadcast %118 : f32 to vector<8x128xf32>
    %120 = arith.mulf %7, %119 : vector<8x128xf32>
    %121 = arith.addf %113, %120 : vector<8x128xf32>
    %c1_64 = arith.constant 1 : index
    %122 = memref.load %arg4[%c1_64] : memref<2xf32, #tpu.memory_space<smem>>
    %123 = vector.broadcast %122 : f32 to vector<8x128xf32>
    %124 = arith.addf %117, %123 : vector<8x128xf32>
    %c1_65 = arith.constant 1 : index
    %125 = memref.load %arg6[%c1_65] : memref<2xf32, #tpu.memory_space<smem>>
    %126 = vector.broadcast %125 : f32 to vector<8x128xf32>
    %127 = arith.addf %121, %126 : vector<8x128xf32>
    %cst_66 = arith.constant 0.000000e+00 : f32
    %128 = vector.broadcast %cst_66 : f32 to vector<8x128xf32>
    %129 = arith.maximumf %127, %128 : vector<8x128xf32>
    %130 = vector.broadcast %cst_66 : f32 to vector<8x128xf32>
    %131 = arith.subf %127, %130 : vector<8x128xf32>
    %132 = arith.cmpf one, %131, %131 : vector<8x128xf32>
    %133 = vector.broadcast %cst_66 : f32 to vector<8x128xf32>
    %134 = arith.addf %127, %133 : vector<8x128xf32>
    %135 = math.absf %131 : vector<8x128xf32>
    %cst_67 = arith.constant 0.000000e+00 : f32
    %136 = vector.broadcast %cst_67 : f32 to vector<8x128xf32>
    %137 = arith.subf %136, %135 : vector<8x128xf32>
    %138 = math.exp %137 : vector<8x128xf32>
    %139 = math.log1p %138 : vector<8x128xf32>
    %140 = arith.addf %129, %139 : vector<8x128xf32>
    %141 = arith.select %132, %134, %140 : vector<8x128xi1>, vector<8x128xf32>
    %142 = math.sqrt %141 : vector<8x128xf32>
    %cst_68 = arith.constant 9.99999974E-6 : f32
    %143 = vector.broadcast %cst_68 : f32 to vector<8x128xf32>
    %144 = arith.addf %142, %143 : vector<8x128xf32>
    %c1_69 = arith.constant 1 : index
    %c0_70 = arith.constant 0 : index
    %c0_71 = arith.constant 0 : index
    %145 = vector.load %arg2[%c1_69, %c0_70, %c0_71] : memref<2x8x128xf32, #tpu.memory_space<vmem>>, vector<1x8x128xf32>
    %146 = vector.shape_cast %145 : vector<1x8x128xf32> to vector<8x128xf32>
    %147 = arith.mulf %144, %146 : vector<8x128xf32>
    %148 = arith.addf %124, %147 : vector<8x128xf32>
    %c1_72 = arith.constant 1 : index
    %c0_73 = arith.constant 0 : index
    %c0_74 = arith.constant 0 : index
    %149 = vector.load %arg11[%c1_72, %c0_73, %c0_74] : memref<2x8x128xf32, #tpu.memory_space<vmem>>, vector<1x8x128xf32>
    %150 = vector.shape_cast %149 : vector<1x8x128xf32> to vector<8x128xf32>
    %151 = vector.shape_cast %124 : vector<8x128xf32> to vector<1x8x128xf32>
    tpu.vector_store %arg11[%c1_72, %c0_73, %c0_74], %151 {strides = array<i32>} : memref<2x8x128xf32, #tpu.memory_space<vmem>>, vector<1x8x128xf32>,
    %c1_75 = arith.constant 1 : index
    %c0_76 = arith.constant 0 : index
    %c0_77 = arith.constant 0 : index
    %152 = vector.load %arg12[%c1_75, %c0_76, %c0_77] : memref<2x8x128xf32, #tpu.memory_space<vmem>>, vector<1x8x128xf32>
    %153 = vector.shape_cast %152 : vector<1x8x128xf32> to vector<8x128xf32>
    %154 = vector.shape_cast %141 : vector<8x128xf32> to vector<1x8x128xf32>
    tpu.vector_store %arg12[%c1_75, %c0_76, %c0_77], %154 {strides = array<i32>} : memref<2x8x128xf32, #tpu.memory_space<vmem>>, vector<1x8x128xf32>,
    %c1_78 = arith.constant 1 : index
    %c0_79 = arith.constant 0 : index
    %c0_80 = arith.constant 0 : index
    %155 = vector.load %arg10[%c1_78, %c0_79, %c0_80] : memref<2x8x128xf32, #tpu.memory_space<vmem>>, vector<1x8x128xf32>
    %156 = vector.shape_cast %155 : vector<1x8x128xf32> to vector<8x128xf32>
    %157 = vector.shape_cast %148 : vector<8x128xf32> to vector<1x8x128xf32>
    tpu.vector_store %arg10[%c1_78, %c0_79, %c0_80], %157 {strides = array<i32>} : memref<2x8x128xf32, #tpu.memory_space<vmem>>, vector<1x8x128xf32>,
    %158 = math.log %144 : vector<8x128xf32>
    %159 = arith.subf %84, %158 : vector<8x128xf32>
    %cst_81 = arith.constant 5.000000e-01 : f32
    %cst_82 = arith.constant 1.83787704 : f32
    %160 = arith.mulf %cst_81, %cst_82 : f32
    %161 = vector.broadcast %160 : f32 to vector<8x128xf32>
    %162 = arith.subf %159, %161 : vector<8x128xf32>
    %163 = arith.mulf %146, %146 : vector<8x128xf32>
    %cst_83 = arith.constant 5.000000e-01 : f32
    %164 = vector.broadcast %cst_83 : f32 to vector<8x128xf32>
    %165 = arith.mulf %164, %163 : vector<8x128xf32>
    %166 = arith.subf %162, %165 : vector<8x128xf32>
    %cst_84 = arith.constant 5.000000e-01 : f32
    %cst_85 = arith.constant 1.83787704 : f32
    %167 = arith.mulf %cst_84, %cst_85 : f32
    %168 = vector.broadcast %167 : f32 to vector<8x128xf32>
    %169 = arith.subf %91, %168 : vector<8x128xf32>
    %170 = arith.mulf %148, %148 : vector<8x128xf32>
    %cst_86 = arith.constant 5.000000e-01 : f32
    %171 = vector.broadcast %cst_86 : f32 to vector<8x128xf32>
    %172 = arith.mulf %171, %170 : vector<8x128xf32>
    %173 = arith.subf %169, %172 : vector<8x128xf32>
    %174 = arith.subf %166, %173 : vector<8x128xf32>
    %cst_87 = arith.constant 0.000000e+00 : f32
    %175 = vector.broadcast %cst_87 : f32 to vector<8x128xf32>
    %cst_88 = arith.constant 0.000000e+00 : f32
    %176 = vector.broadcast %cst_88 : f32 to vector<8x128xf32>
    %c0_89 = arith.constant 0 : index
    %c0_90 = arith.constant 0 : index
    %177 = memref.load %arg7[%c0_89, %c0_90] : memref<2x8xf32, #tpu.memory_space<smem>>
    %178 = vector.broadcast %177 : f32 to vector<8x128xf32>
    %179 = arith.mulf %66, %178 : vector<8x128xf32>
    %c1_91 = arith.constant 1 : index
    %c0_92 = arith.constant 0 : index
    %180 = memref.load %arg7[%c1_91, %c0_92] : memref<2x8xf32, #tpu.memory_space<smem>>
    %181 = vector.broadcast %180 : f32 to vector<8x128xf32>
    %182 = arith.mulf %148, %181 : vector<8x128xf32>
    %183 = arith.addf %179, %182 : vector<8x128xf32>
    %c0_93 = arith.constant 0 : index
    %184 = memref.load %arg8[%c0_93] : memref<8xf32, #tpu.memory_space<smem>>
    %185 = vector.broadcast %184 : f32 to vector<8x128xf32>
    %186 = arith.addf %183, %185 : vector<8x128xf32>
    %c0_94 = arith.constant 0 : index
    %c0_95 = arith.constant 0 : index
    %c0_96 = arith.constant 0 : index
    %187 = vector.load %arg9[%c0_94, %c0_95, %c0_96] : memref<8x8x128xf32, #tpu.memory_space<vmem>>, vector<1x8x128xf32>
    %188 = vector.shape_cast %187 : vector<1x8x128xf32> to vector<8x128xf32>
    %189 = vector.shape_cast %186 : vector<8x128xf32> to vector<1x8x128xf32>
    tpu.vector_store %arg9[%c0_94, %c0_95, %c0_96], %189 {strides = array<i32>} : memref<8x8x128xf32, #tpu.memory_space<vmem>>, vector<1x8x128xf32>,
    %190 = arith.subf %1, %186 : vector<8x128xf32>
    %cst_97 = arith.constant 1.500000e-01 : f32
    %191 = vector.broadcast %cst_97 : f32 to vector<8x128xf32>
    %192 = arith.mulf %191, %190 : vector<8x128xf32>
    %cst_98 = arith.constant -8.500000e-01 : f32
    %193 = vector.broadcast %cst_98 : f32 to vector<8x128xf32>
    %194 = arith.mulf %193, %190 : vector<8x128xf32>
    %195 = arith.maximumf %192, %194 : vector<8x128xf32>
    %196 = arith.addf %175, %195 : vector<8x128xf32>
    %c0_99 = arith.constant 0 : index
    %c1_100 = arith.constant 1 : index
    %197 = memref.load %arg7[%c0_99, %c1_100] : memref<2x8xf32, #tpu.memory_space<smem>>
    %198 = vector.broadcast %197 : f32 to vector<8x128xf32>
    %199 = arith.mulf %66, %198 : vector<8x128xf32>
    %c1_101 = arith.constant 1 : index
    %c1_102 = arith.constant 1 : index
    %200 = memref.load %arg7[%c1_101, %c1_102] : memref<2x8xf32, #tpu.memory_space<smem>>
    %201 = vector.broadcast %200 : f32 to vector<8x128xf32>
    %202 = arith.mulf %148, %201 : vector<8x128xf32>
    %203 = arith.addf %199, %202 : vector<8x128xf32>
    %c1_103 = arith.constant 1 : index
    %204 = memref.load %arg8[%c1_103] : memref<8xf32, #tpu.memory_space<smem>>
    %205 = vector.broadcast %204 : f32 to vector<8x128xf32>
    %206 = arith.addf %203, %205 : vector<8x128xf32>
    %c1_104 = arith.constant 1 : index
    %c0_105 = arith.constant 0 : index
    %c0_106 = arith.constant 0 : index
    %207 = vector.load %arg9[%c1_104, %c0_105, %c0_106] : memref<8x8x128xf32, #tpu.memory_space<vmem>>, vector<1x8x128xf32>
    %208 = vector.shape_cast %207 : vector<1x8x128xf32> to vector<8x128xf32>
    %209 = vector.shape_cast %206 : vector<8x128xf32> to vector<1x8x128xf32>
    tpu.vector_store %arg9[%c1_104, %c0_105, %c0_106], %209 {strides = array<i32>} : memref<8x8x128xf32, #tpu.memory_space<vmem>>, vector<1x8x128xf32>,
    %210 = arith.subf %3, %206 : vector<8x128xf32>
    %cst_107 = arith.constant 1.500000e-01 : f32
    %211 = vector.broadcast %cst_107 : f32 to vector<8x128xf32>
    %212 = arith.mulf %211, %210 : vector<8x128xf32>
    %cst_108 = arith.constant -8.500000e-01 : f32
    %213 = vector.broadcast %cst_108 : f32 to vector<8x128xf32>
    %214 = arith.mulf %213, %210 : vector<8x128xf32>
    %215 = arith.maximumf %212, %214 : vector<8x128xf32>
    %216 = arith.addf %196, %215 : vector<8x128xf32>
    %c0_109 = arith.constant 0 : index
    %c2_110 = arith.constant 2 : index
    %217 = memref.load %arg7[%c0_109, %c2_110] : memref<2x8xf32, #tpu.memory_space<smem>>
    %218 = vector.broadcast %217 : f32 to vector<8x128xf32>
    %219 = arith.mulf %66, %218 : vector<8x128xf32>
    %c1_111 = arith.constant 1 : index
    %c2_112 = arith.constant 2 : index
    %220 = memref.load %arg7[%c1_111, %c2_112] : memref<2x8xf32, #tpu.memory_space<smem>>
    %221 = vector.broadcast %220 : f32 to vector<8x128xf32>
    %222 = arith.mulf %148, %221 : vector<8x128xf32>
    %223 = arith.addf %219, %222 : vector<8x128xf32>
    %c2_113 = arith.constant 2 : index
    %224 = memref.load %arg8[%c2_113] : memref<8xf32, #tpu.memory_space<smem>>
    %225 = vector.broadcast %224 : f32 to vector<8x128xf32>
    %226 = arith.addf %223, %225 : vector<8x128xf32>
    %c2_114 = arith.constant 2 : index
    %c0_115 = arith.constant 0 : index
    %c0_116 = arith.constant 0 : index
    %227 = vector.load %arg9[%c2_114, %c0_115, %c0_116] : memref<8x8x128xf32, #tpu.memory_space<vmem>>, vector<1x8x128xf32>
    %228 = vector.shape_cast %227 : vector<1x8x128xf32> to vector<8x128xf32>
    %229 = vector.shape_cast %226 : vector<8x128xf32> to vector<1x8x128xf32>
    tpu.vector_store %arg9[%c2_114, %c0_115, %c0_116], %229 {strides = array<i32>} : memref<8x8x128xf32, #tpu.memory_space<vmem>>, vector<1x8x128xf32>,
    %230 = arith.subf %5, %226 : vector<8x128xf32>
    %cst_117 = arith.constant 1.500000e-01 : f32
    %231 = vector.broadcast %cst_117 : f32 to vector<8x128xf32>
    %232 = arith.mulf %231, %230 : vector<8x128xf32>
    %cst_118 = arith.constant -8.500000e-01 : f32
    %233 = vector.broadcast %cst_118 : f32 to vector<8x128xf32>
    %234 = arith.mulf %233, %230 : vector<8x128xf32>
    %235 = arith.maximumf %232, %234 : vector<8x128xf32>
    %236 = arith.addf %216, %235 : vector<8x128xf32>
    %c0_119 = arith.constant 0 : index
    %c3_120 = arith.constant 3 : index
    %237 = memref.load %arg7[%c0_119, %c3_120] : memref<2x8xf32, #tpu.memory_space<smem>>
    %238 = vector.broadcast %237 : f32 to vector<8x128xf32>
    %239 = arith.mulf %66, %238 : vector<8x128xf32>
    %c1_121 = arith.constant 1 : index
    %c3_122 = arith.constant 3 : index
    %240 = memref.load %arg7[%c1_121, %c3_122] : memref<2x8xf32, #tpu.memory_space<smem>>
    %241 = vector.broadcast %240 : f32 to vector<8x128xf32>
    %242 = arith.mulf %148, %241 : vector<8x128xf32>
    %243 = arith.addf %239, %242 : vector<8x128xf32>
    %c3_123 = arith.constant 3 : index
    %244 = memref.load %arg8[%c3_123] : memref<8xf32, #tpu.memory_space<smem>>
    %245 = vector.broadcast %244 : f32 to vector<8x128xf32>
    %246 = arith.addf %243, %245 : vector<8x128xf32>
    %c3_124 = arith.constant 3 : index
    %c0_125 = arith.constant 0 : index
    %c0_126 = arith.constant 0 : index
    %247 = vector.load %arg9[%c3_124, %c0_125, %c0_126] : memref<8x8x128xf32, #tpu.memory_space<vmem>>, vector<1x8x128xf32>
    %248 = vector.shape_cast %247 : vector<1x8x128xf32> to vector<8x128xf32>
    %249 = vector.shape_cast %246 : vector<8x128xf32> to vector<1x8x128xf32>
    tpu.vector_store %arg9[%c3_124, %c0_125, %c0_126], %249 {strides = array<i32>} : memref<8x8x128xf32, #tpu.memory_space<vmem>>, vector<1x8x128xf32>,
    %250 = arith.subf %7, %246 : vector<8x128xf32>
    %cst_127 = arith.constant 1.500000e-01 : f32
    %251 = vector.broadcast %cst_127 : f32 to vector<8x128xf32>
    %252 = arith.mulf %251, %250 : vector<8x128xf32>
    %cst_128 = arith.constant -8.500000e-01 : f32
    %253 = vector.broadcast %cst_128 : f32 to vector<8x128xf32>
    %254 = arith.mulf %253, %250 : vector<8x128xf32>
    %255 = arith.maximumf %252, %254 : vector<8x128xf32>
    %256 = arith.addf %236, %255 : vector<8x128xf32>
    %c0_129 = arith.constant 0 : index
    %c4 = arith.constant 4 : index
    %257 = memref.load %arg7[%c0_129, %c4] : memref<2x8xf32, #tpu.memory_space<smem>>
    %258 = vector.broadcast %257 : f32 to vector<8x128xf32>
    %259 = arith.mulf %66, %258 : vector<8x128xf32>
    %c1_130 = arith.constant 1 : index
    %c4_131 = arith.constant 4 : index
    %260 = memref.load %arg7[%c1_130, %c4_131] : memref<2x8xf32, #tpu.memory_space<smem>>
    %261 = vector.broadcast %260 : f32 to vector<8x128xf32>
    %262 = arith.mulf %148, %261 : vector<8x128xf32>
    %263 = arith.addf %259, %262 : vector<8x128xf32>
    %c4_132 = arith.constant 4 : index
    %264 = memref.load %arg8[%c4_132] : memref<8xf32, #tpu.memory_space<smem>>
    %265 = vector.broadcast %264 : f32 to vector<8x128xf32>
    %266 = arith.addf %263, %265 : vector<8x128xf32>
    %c4_133 = arith.constant 4 : index
    %c0_134 = arith.constant 0 : index
    %c0_135 = arith.constant 0 : index
    %267 = vector.load %arg9[%c4_133, %c0_134, %c0_135] : memref<8x8x128xf32, #tpu.memory_space<vmem>>, vector<1x8x128xf32>
    %268 = vector.shape_cast %267 : vector<1x8x128xf32> to vector<8x128xf32>
    %269 = vector.shape_cast %266 : vector<8x128xf32> to vector<1x8x128xf32>
    tpu.vector_store %arg9[%c4_133, %c0_134, %c0_135], %269 {strides = array<i32>} : memref<8x8x128xf32, #tpu.memory_space<vmem>>, vector<1x8x128xf32>,
    %270 = arith.subf %1, %266 : vector<8x128xf32>
    %cst_136 = arith.constant 5.000000e-01 : f32
    %271 = vector.broadcast %cst_136 : f32 to vector<8x128xf32>
    %272 = arith.mulf %271, %270 : vector<8x128xf32>
    %cst_137 = arith.constant -5.000000e-01 : f32
    %273 = vector.broadcast %cst_137 : f32 to vector<8x128xf32>
    %274 = arith.mulf %273, %270 : vector<8x128xf32>
    %275 = arith.maximumf %272, %274 : vector<8x128xf32>
    %276 = arith.addf %176, %275 : vector<8x128xf32>
    %c0_138 = arith.constant 0 : index
    %c5 = arith.constant 5 : index
    %277 = memref.load %arg7[%c0_138, %c5] : memref<2x8xf32, #tpu.memory_space<smem>>
    %278 = vector.broadcast %277 : f32 to vector<8x128xf32>
    %279 = arith.mulf %66, %278 : vector<8x128xf32>
    %c1_139 = arith.constant 1 : index
    %c5_140 = arith.constant 5 : index
    %280 = memref.load %arg7[%c1_139, %c5_140] : memref<2x8xf32, #tpu.memory_space<smem>>
    %281 = vector.broadcast %280 : f32 to vector<8x128xf32>
    %282 = arith.mulf %148, %281 : vector<8x128xf32>
    %283 = arith.addf %279, %282 : vector<8x128xf32>
    %c5_141 = arith.constant 5 : index
    %284 = memref.load %arg8[%c5_141] : memref<8xf32, #tpu.memory_space<smem>>
    %285 = vector.broadcast %284 : f32 to vector<8x128xf32>
    %286 = arith.addf %283, %285 : vector<8x128xf32>
    %c5_142 = arith.constant 5 : index
    %c0_143 = arith.constant 0 : index
    %c0_144 = arith.constant 0 : index
    %287 = vector.load %arg9[%c5_142, %c0_143, %c0_144] : memref<8x8x128xf32, #tpu.memory_space<vmem>>, vector<1x8x128xf32>
    %288 = vector.shape_cast %287 : vector<1x8x128xf32> to vector<8x128xf32>
    %289 = vector.shape_cast %286 : vector<8x128xf32> to vector<1x8x128xf32>
    tpu.vector_store %arg9[%c5_142, %c0_143, %c0_144], %289 {strides = array<i32>} : memref<8x8x128xf32, #tpu.memory_space<vmem>>, vector<1x8x128xf32>,
    %290 = arith.subf %3, %286 : vector<8x128xf32>
    %cst_145 = arith.constant 5.000000e-01 : f32
    %291 = vector.broadcast %cst_145 : f32 to vector<8x128xf32>
    %292 = arith.mulf %291, %290 : vector<8x128xf32>
    %cst_146 = arith.constant -5.000000e-01 : f32
    %293 = vector.broadcast %cst_146 : f32 to vector<8x128xf32>
    %294 = arith.mulf %293, %290 : vector<8x128xf32>
    %295 = arith.maximumf %292, %294 : vector<8x128xf32>
    %296 = arith.addf %276, %295 : vector<8x128xf32>
    %c0_147 = arith.constant 0 : index
    %c6 = arith.constant 6 : index
    %297 = memref.load %arg7[%c0_147, %c6] : memref<2x8xf32, #tpu.memory_space<smem>>
    %298 = vector.broadcast %297 : f32 to vector<8x128xf32>
    %299 = arith.mulf %66, %298 : vector<8x128xf32>
    %c1_148 = arith.constant 1 : index
    %c6_149 = arith.constant 6 : index
    %300 = memref.load %arg7[%c1_148, %c6_149] : memref<2x8xf32, #tpu.memory_space<smem>>
    %301 = vector.broadcast %300 : f32 to vector<8x128xf32>
    %302 = arith.mulf %148, %301 : vector<8x128xf32>
    %303 = arith.addf %299, %302 : vector<8x128xf32>
    %c6_150 = arith.constant 6 : index
    %304 = memref.load %arg8[%c6_150] : memref<8xf32, #tpu.memory_space<smem>>
    %305 = vector.broadcast %304 : f32 to vector<8x128xf32>
    %306 = arith.addf %303, %305 : vector<8x128xf32>
    %c6_151 = arith.constant 6 : index
    %c0_152 = arith.constant 0 : index
    %c0_153 = arith.constant 0 : index
    %307 = vector.load %arg9[%c6_151, %c0_152, %c0_153] : memref<8x8x128xf32, #tpu.memory_space<vmem>>, vector<1x8x128xf32>
    %308 = vector.shape_cast %307 : vector<1x8x128xf32> to vector<8x128xf32>
    %309 = vector.shape_cast %306 : vector<8x128xf32> to vector<1x8x128xf32>
    tpu.vector_store %arg9[%c6_151, %c0_152, %c0_153], %309 {strides = array<i32>} : memref<8x8x128xf32, #tpu.memory_space<vmem>>, vector<1x8x128xf32>,
    %310 = arith.subf %5, %306 : vector<8x128xf32>
    %cst_154 = arith.constant 5.000000e-01 : f32
    %311 = vector.broadcast %cst_154 : f32 to vector<8x128xf32>
    %312 = arith.mulf %311, %310 : vector<8x128xf32>
    %cst_155 = arith.constant -5.000000e-01 : f32
    %313 = vector.broadcast %cst_155 : f32 to vector<8x128xf32>
    %314 = arith.mulf %313, %310 : vector<8x128xf32>
    %315 = arith.maximumf %312, %314 : vector<8x128xf32>
    %316 = arith.addf %296, %315 : vector<8x128xf32>
    %c0_156 = arith.constant 0 : index
    %c7 = arith.constant 7 : index
    %317 = memref.load %arg7[%c0_156, %c7] : memref<2x8xf32, #tpu.memory_space<smem>>
    %318 = vector.broadcast %317 : f32 to vector<8x128xf32>
    %319 = arith.mulf %66, %318 : vector<8x128xf32>
    %c1_157 = arith.constant 1 : index
    %c7_158 = arith.constant 7 : index
    %320 = memref.load %arg7[%c1_157, %c7_158] : memref<2x8xf32, #tpu.memory_space<smem>>
    %321 = vector.broadcast %320 : f32 to vector<8x128xf32>
    %322 = arith.mulf %148, %321 : vector<8x128xf32>
    %323 = arith.addf %319, %322 : vector<8x128xf32>
    %c7_159 = arith.constant 7 : index
    %324 = memref.load %arg8[%c7_159] : memref<8xf32, #tpu.memory_space<smem>>
    %325 = vector.broadcast %324 : f32 to vector<8x128xf32>
    %326 = arith.addf %323, %325 : vector<8x128xf32>
    %c7_160 = arith.constant 7 : index
    %c0_161 = arith.constant 0 : index
    %c0_162 = arith.constant 0 : index
    %327 = vector.load %arg9[%c7_160, %c0_161, %c0_162] : memref<8x8x128xf32, #tpu.memory_space<vmem>>, vector<1x8x128xf32>
    %328 = vector.shape_cast %327 : vector<1x8x128xf32> to vector<8x128xf32>
    %329 = vector.shape_cast %326 : vector<8x128xf32> to vector<1x8x128xf32>
    tpu.vector_store %arg9[%c7_160, %c0_161, %c0_162], %329 {strides = array<i32>} : memref<8x8x128xf32, #tpu.memory_space<vmem>>, vector<1x8x128xf32>,
    %330 = arith.subf %7, %326 : vector<8x128xf32>
    %cst_163 = arith.constant 5.000000e-01 : f32
    %331 = vector.broadcast %cst_163 : f32 to vector<8x128xf32>
    %332 = arith.mulf %331, %330 : vector<8x128xf32>
    %cst_164 = arith.constant -5.000000e-01 : f32
    %333 = vector.broadcast %cst_164 : f32 to vector<8x128xf32>
    %334 = arith.mulf %333, %330 : vector<8x128xf32>
    %335 = arith.maximumf %332, %334 : vector<8x128xf32>
    %336 = arith.addf %316, %335 : vector<8x128xf32>
    %337 = arith.addf %256, %336 : vector<8x128xf32>
    %cst_165 = arith.constant 5.000000e-01 : f32
    %338 = vector.broadcast %cst_165 : f32 to vector<8x128xf32>
    %339 = arith.mulf %338, %337 : vector<8x128xf32>
    %cst_166 = arith.constant 0.000000e+00 : f32
    %340 = vector.broadcast %cst_166 : f32 to vector<8x128xf32>
    %341 = arith.subf %340, %339 : vector<8x128xf32>
    %cst_167 = arith.constant 2.800000e-01 : f32
    %342 = vector.broadcast %cst_167 : f32 to vector<8x128xf32>
    %343 = arith.mulf %342, %174 : vector<8x128xf32>
    %344 = arith.subf %341, %343 : vector<8x128xf32>
    %345 = tpu.iota {dimensions = array<i32: 0>} : vector<8x128xi32>
    %346 = tpu.iota {dimensions = array<i32: 1>} : vector<8x128xi32>
    %c8_i32 = arith.constant 8 : i32
    %347 = arith.muli %arg0, %c8_i32 : i32
    %348 = vector.broadcast %347 : i32 to vector<8x128xi32>
    %349 = arith.addi %348, %345 : vector<8x128xi32>
    %c128_i32 = arith.constant 128 : i32
    %350 = vector.broadcast %c128_i32 : i32 to vector<8x128xi32>
    %351 = arith.muli %349, %350 : vector<8x128xi32>
    %352 = arith.addi %351, %346 : vector<8x128xi32>
    %c8_i32_168 = arith.constant 8 : i32
    %353 = vector.broadcast %c8_i32_168 : i32 to vector<8x128xi32>
    %354 = arith.cmpi slt, %352, %353 : vector<8x128xi32>
    %cst_169 = arith.constant 0.000000e+00 : f32
    %355 = vector.broadcast %cst_169 : f32 to vector<8x128xf32>
    %356 = arith.select %354, %339, %355 : vector<8x128xi1>, vector<8x128xf32>
    %357 = vector.shape_cast %356 : vector<8x128xf32> to vector<1x8x128xf32>
    %cst_170 = arith.constant dense<0.000000e+00> : vector<1xf32>
    %358 = vector.multi_reduction <add>, %357, %cst_170 [1, 2] : vector<1x8x128xf32> to vector<1xf32>
    %359 = vector.shape_cast %358 : vector<1xf32> to vector<1x1x1xf32>
    %360 = vector.extract %359[0, 0, 0] : f32 from vector<1x1x1xf32>
    %cst_171 = arith.constant 0.000000e+00 : f32
    %361 = vector.broadcast %cst_171 : f32 to vector<8x128xf32>
    %362 = arith.select %354, %174, %361 : vector<8x128xi1>, vector<8x128xf32>
    %363 = vector.shape_cast %362 : vector<8x128xf32> to vector<1x8x128xf32>
    %cst_172 = arith.constant dense<0.000000e+00> : vector<1xf32>
    %364 = vector.multi_reduction <add>, %363, %cst_172 [1, 2] : vector<1x8x128xf32> to vector<1xf32>
    %365 = vector.shape_cast %364 : vector<1xf32> to vector<1x1x1xf32>
    %366 = vector.extract %365[0, 0, 0] : f32 from vector<1x1x1xf32>
    %cst_173 = arith.constant 0.000000e+00 : f32
    %367 = vector.broadcast %cst_173 : f32 to vector<8x128xf32>
    %368 = arith.select %354, %344, %367 : vector<8x128xi1>, vector<8x128xf32>
    %369 = vector.shape_cast %368 : vector<8x128xf32> to vector<1x8x128xf32>
    %cst_174 = arith.constant dense<0.000000e+00> : vector<1xf32>
    %370 = vector.multi_reduction <add>, %369, %cst_174 [1, 2] : vector<1x8x128xf32> to vector<1xf32>
    %371 = vector.shape_cast %370 : vector<1xf32> to vector<1x1x1xf32>
    %372 = vector.extract %371[0, 0, 0] : f32 from vector<1x1x1xf32>
    %373 = tpu.iota {dimensions = array<i32: 0>} : vector<8x128xi32>
    %c0_i32 = arith.constant 0 : i32
    %374 = vector.broadcast %c0_i32 : i32 to vector<8x128xi32>
    %375 = arith.cmpi eq, %373, %374 : vector<8x128xi32>
    %c1_i32 = arith.constant 1 : i32
    %376 = vector.broadcast %c1_i32 : i32 to vector<8x128xi32>
    %377 = arith.cmpi eq, %373, %376 : vector<8x128xi32>
    %c2_i32 = arith.constant 2 : i32
    %378 = vector.broadcast %c2_i32 : i32 to vector<8x128xi32>
    %379 = arith.cmpi eq, %373, %378 : vector<8x128xi32>
    %cst_175 = arith.constant 0.000000e+00 : f32
    %380 = vector.broadcast %372 : f32 to vector<8x128xf32>
    %381 = vector.broadcast %cst_175 : f32 to vector<8x128xf32>
    %382 = arith.select %379, %380, %381 : vector<8x128xi1>, vector<8x128xf32>
    %383 = vector.broadcast %366 : f32 to vector<8x128xf32>
    %384 = arith.select %377, %383, %382 : vector<8x128xi1>, vector<8x128xf32>
    %385 = vector.broadcast %360 : f32 to vector<8x128xf32>
    %386 = arith.select %375, %385, %384 : vector<8x128xi1>, vector<8x128xf32>
    %c0_176 = arith.constant 0 : index
    %c0_177 = arith.constant 0 : index
    %c0_178 = arith.constant 0 : index
    %387 = vector.load %arg13[%c0_176, %c0_177, %c0_178] : memref<1x8x128xf32, #tpu.memory_space<vmem>>, vector<1x8x128xf32>
    %388 = vector.shape_cast %387 : vector<1x8x128xf32> to vector<8x128xf32>
    %389 = vector.shape_cast %386 : vector<8x128xf32> to vector<1x8x128xf32>
    tpu.vector_store %arg13[%c0_176, %c0_177, %c0_178], %389 {strides = array<i32>} : memref<1x8x128xf32, #tpu.memory_space<vmem>>, vector<1x8x128xf32>,
    return
  }
  func.func @transform_0(%arg0: i32) -> (i32, i32, i32) {
    %c0_i32 = arith.constant 0 : i32
    %c0_i32_0 = arith.constant 0 : i32
    %c0_i32_1 = arith.constant 0 : i32
    return %c0_i32, %arg0, %c0_i32_0 : i32, i32, i32
  }
  func.func @transform_1(%arg0: i32) -> (i32, i32, i32) {
    %c0_i32 = arith.constant 0 : i32
    %c0_i32_0 = arith.constant 0 : i32
    %c0_i32_1 = arith.constant 0 : i32
    return %c0_i32, %arg0, %c0_i32_0 : i32, i32, i32
  }
  func.func @transform_2(%arg0: i32) -> (i32, i32) {
    %c0_i32 = arith.constant 0 : i32
    %c0_i32_0 = arith.constant 0 : i32
    %c0_i32_1 = arith.constant 0 : i32
    return %c0_i32, %c0_i32_0 : i32, i32
  }
  func.func @transform_3(%arg0: i32) -> i32 {
    %c0_i32 = arith.constant 0 : i32
    %c0_i32_0 = arith.constant 0 : i32
    return %c0_i32 : i32
  }
  func.func @transform_4(%arg0: i32) -> (i32, i32) {
    %c0_i32 = arith.constant 0 : i32
    %c0_i32_0 = arith.constant 0 : i32
    %c0_i32_1 = arith.constant 0 : i32
    return %c0_i32, %c0_i32_0 : i32, i32
  }
  func.func @transform_5(%arg0: i32) -> i32 {
    %c0_i32 = arith.constant 0 : i32
    %c0_i32_0 = arith.constant 0 : i32
    return %c0_i32 : i32
  }
  func.func @transform_6(%arg0: i32) -> (i32, i32) {
    %c0_i32 = arith.constant 0 : i32
    %c0_i32_0 = arith.constant 0 : i32
    %c0_i32_1 = arith.constant 0 : i32
    return %c0_i32, %c0_i32_0 : i32, i32
  }
  func.func @transform_7(%arg0: i32) -> i32 {
    %c0_i32 = arith.constant 0 : i32
    %c0_i32_0 = arith.constant 0 : i32
    return %c0_i32 : i32
  }
  func.func @transform_8(%arg0: i32) -> (i32, i32, i32) {
    %c0_i32 = arith.constant 0 : i32
    %c0_i32_0 = arith.constant 0 : i32
    %c0_i32_1 = arith.constant 0 : i32
    return %c0_i32, %arg0, %c0_i32_0 : i32, i32, i32
  }
  func.func @transform_9(%arg0: i32) -> (i32, i32, i32) {
    %c0_i32 = arith.constant 0 : i32
    %c0_i32_0 = arith.constant 0 : i32
    %c0_i32_1 = arith.constant 0 : i32
    return %c0_i32, %arg0, %c0_i32_0 : i32, i32, i32
  }
  func.func @transform_10(%arg0: i32) -> (i32, i32, i32) {
    %c0_i32 = arith.constant 0 : i32
    %c0_i32_0 = arith.constant 0 : i32
    %c0_i32_1 = arith.constant 0 : i32
    return %c0_i32, %arg0, %c0_i32_0 : i32, i32, i32
  }
  func.func @transform_11(%arg0: i32) -> (i32, i32, i32) {
    %c0_i32 = arith.constant 0 : i32
    %c0_i32_0 = arith.constant 0 : i32
    %c0_i32_1 = arith.constant 0 : i32
    return %c0_i32, %arg0, %c0_i32_0 : i32, i32, i32
  }
  func.func @transform_12(%arg0: i32) -> (i32, i32, i32) {
    %c0_i32 = arith.constant 0 : i32
    %c0_i32_0 = arith.constant 0 : i32
    %c0_i32_1 = arith.constant 0 : i32
    return %arg0, %c0_i32, %c0_i32_0 : i32, i32, i32
  }
}

</mosaic_0001>

<llo_original>
// kernel: basemodel_forward.1
$region0: #{basemodel_forward.1}
  #allocation0 [shape = 'u32[]', space=smem, size = 0x4, offset = 0x4, fixed_abs, tag = 'smem constant byte address 0x4 - core index']
  #allocation1 [shape = 'u32[144,128]{1,0:T(1,128)}', space=vmem, size = 0x12000, scoped, tag = 'internal scratch']
  %s0 = inlined_call_operand.vmem [shape: f32[4,8,128], index: 0, kind: input, shape index: {}]
  %s1 = inlined_call_operand.vmem [shape: f32[2,8,128], index: 1, kind: input, shape index: {}]
  %s2 = inlined_call_operand.vmem [shape: f32[4,2], index: 2, kind: input, shape index: {}]
  %s3 = inlined_call_operand.vmem [shape: f32[2], index: 3, kind: input, shape index: {}]
  %s4 = inlined_call_operand.vmem [shape: f32[4,2], index: 4, kind: input, shape index: {}]
  %s5 = inlined_call_operand.vmem [shape: f32[2], index: 5, kind: input, shape index: {}]
  %s6 = inlined_call_operand.vmem [shape: f32[2,8], index: 6, kind: input, shape index: {}]
  %s7 = inlined_call_operand.vmem [shape: f32[8], index: 7, kind: input, shape index: {}]
  %s8 = inlined_call_operand.vmem [shape: f32[8,8,128], index: 8, kind: output, shape index: {0}]
  %s9 = inlined_call_operand.vmem [shape: f32[2,8,128], index: 9, kind: output, shape index: {1}]
  %s10 = inlined_call_operand.vmem [shape: f32[2,8,128], index: 10, kind: output, shape index: {2}]
  %s11 = inlined_call_operand.vmem [shape: f32[2,8,128], index: 11, kind: output, shape index: {3}]
  %s12 = inlined_call_operand.vmem [shape: f32[1,8,128], index: 12, kind: output, shape index: {4}]
  %13 = xla_tuple %s8, %s9, %s10, %s11, %s12
  %s14 = sld [smem:[#allocation0]]
  $region98: #{basemodel_forward.1} parent=0
    _
  %s16 = ssub.s32 1, %s14
  %s17 = scalar_select 0, %s16, %s14
  $region1: #{basemodel_forward.1} parent=0
    #allocation2 [shape = 'u8[2048]{0}', space=smem, size = 0x800, scoped, tag = 'input window, operand 2, single buffered']
    #allocation3 [shape = 's32[1]{0}', space=sflag, size = 0x4, scoped, tag = 'scoped memory for basemodel_forward.1']
    #allocation4 [shape = 'u8[512]{0}', space=smem, size = 0x200, scoped, tag = 'input window, operand 3, single buffered']
    #allocation5 [shape = 's32[1]{0}', space=sflag, size = 0x4, scoped, tag = 'scoped memory for basemodel_forward.1']
    #allocation6 [shape = 'u8[2048]{0}', space=smem, size = 0x800, scoped, tag = 'input window, operand 4, single buffered']
    #allocation7 [shape = 'u8[512]{0}', space=smem, size = 0x200, scoped, tag = 'input window, operand 5, single buffered']
    #allocation8 [shape = 's32[1]{0}', space=sflag, size = 0x4, scoped, tag = 'scoped memory for basemodel_forward.1']
    #allocation9 [shape = 'u8[1024]{0}', space=smem, size = 0x400, scoped, tag = 'input window, operand 6, single buffered']
    #allocation10 [shape = 'u8[512]{0}', space=smem, size = 0x200, scoped, tag = 'input window, operand 7, single buffered']
    #allocation11 [shape = 's32[1]{0}', space=sflag, size = 0x4, scoped, tag = 'scoped memory for basemodel_forward.1']
    %18 = vsyncpa [#allocation3], 0
    %19 = vsyncpa [#allocation5], 0
    %20 = vsyncpa [#allocation8], 0
    %21 = vsyncpa [#allocation11], 0
    // Predicated region
    $region2: #{basemodel_forward.1} parent=1 // pred_check
      _
    $region3: #{basemodel_forward.1} parent=1 // pred_check_branch
      %23 = sbr.rel (0) target = $region5
    $region4: #{basemodel_forward.1} parent=1 // pred_region
      _
    $region5: #{basemodel_forward.1} parent=1 // pred_fallthru
      _
    // Predicated region
    $region6: #{basemodel_forward.1} parent=1 // pred_check
      _
    $region7: #{basemodel_forward.1} parent=1 // pred_check_branch
      %25 = sbr.rel (0) target = $region9
    $region8: #{basemodel_forward.1} parent=1 // pred_region
      _
    $region9: #{basemodel_forward.1} parent=1 // pred_fallthru
      _
    // Predicated region
    $region10: #{basemodel_forward.1} parent=1 // pred_check
      _
    $region11: #{basemodel_forward.1} parent=1 // pred_check_branch
      %27 = sbr.rel (0) target = $region13
    $region12: #{basemodel_forward.1} parent=1 // pred_region
      %s29 = ssub.s32 64, 64
      %30 = vsyncadd [#allocation3], %s29
      %s32 = sshll.u32 %s2, 4
      %s33 = int_to_ptr.vmem [resolvable:$true] %s32
      %35 = dma.vmem_to_smem %s33, 64, [#allocation2], [#allocation3]
    $region13: #{basemodel_forward.1} parent=1 // pred_fallthru
      _
    // Predicated region
    $region14: #{basemodel_forward.1} parent=1 // pred_check
      _
    $region15: #{basemodel_forward.1} parent=1 // pred_check_branch
      %37 = sbr.rel (0) target = $region17
    $region16: #{basemodel_forward.1} parent=1 // pred_region
      %s39 = ssub.s32 16, 16
      %40 = vsyncadd [#allocation5], %s39
      %s42 = sshll.u32 %s3, 4
      %s43 = int_to_ptr.vmem [resolvable:$true] %s42
      %45 = dma.vmem_to_smem %s43, 16, [#allocation4], [#allocation5]
    $region17: #{basemodel_forward.1} parent=1 // pred_fallthru
      _
    // Predicated region
    $region18: #{basemodel_forward.1} parent=1 // pred_check
      _
    $region19: #{basemodel_forward.1} parent=1 // pred_check_branch
      %47 = sbr.rel (0) target = $region21
    $region20: #{basemodel_forward.1} parent=1 // pred_region
      %s49 = ssub.s32 64, 64
      %50 = vsyncadd [#allocation5], %s49
      %s52 = sshll.u32 %s4, 4
      %s53 = int_to_ptr.vmem [resolvable:$true] %s52
      %55 = dma.vmem_to_smem %s53, 64, [#allocation6], [#allocation5]
    $region21: #{basemodel_forward.1} parent=1 // pred_fallthru
      _
    // Predicated region
    $region22: #{basemodel_forward.1} parent=1 // pred_check
      _
    $region23: #{basemodel_forward.1} parent=1 // pred_check_branch
      %57 = sbr.rel (0) target = $region25
    $region24: #{basemodel_forward.1} parent=1 // pred_region
      %s59 = ssub.s32 16, 16
      %60 = vsyncadd [#allocation8], %s59
      %s62 = sshll.u32 %s5, 4
      %s63 = int_to_ptr.vmem [resolvable:$true] %s62
      %65 = dma.vmem_to_smem %s63, 16, [#allocation7], [#allocation8]
    $region25: #{basemodel_forward.1} parent=1 // pred_fallthru
      _
    // Predicated region
    $region26: #{basemodel_forward.1} parent=1 // pred_check
      _
    $region27: #{basemodel_forward.1} parent=1 // pred_check_branch
      %67 = sbr.rel (0) target = $region29
    $region28: #{basemodel_forward.1} parent=1 // pred_region
      %s69 = ssub.s32 32, 32
      %70 = vsyncadd [#allocation8], %s69
      %s72 = sshll.u32 %s6, 4
      %s73 = int_to_ptr.vmem [resolvable:$true] %s72
      %75 = dma.vmem_to_smem %s73, 32, [#allocation9], [#allocation8]
    $region29: #{basemodel_forward.1} parent=1 // pred_fallthru
      _
    // Predicated region
    $region30: #{basemodel_forward.1} parent=1 // pred_check
      _
    $region31: #{basemodel_forward.1} parent=1 // pred_check_branch
      %77 = sbr.rel (0) target = $region33
    $region32: #{basemodel_forward.1} parent=1 // pred_region
      %s79 = ssub.s32 16, 16
      %80 = vsyncadd [#allocation11], %s79
      %s82 = sshll.u32 %s7, 4
      %s83 = int_to_ptr.vmem [resolvable:$true] %s82
      %85 = dma.vmem_to_smem %s83, 16, [#allocation10], [#allocation11]
    $region33: #{basemodel_forward.1} parent=1 // pred_fallthru
      _
    // Predicated region
    $region34: #{basemodel_forward.1} parent=1 // pred_check
      _
    $region35: #{basemodel_forward.1} parent=1 // pred_check_branch
      %87 = sbr.rel (0) target = $region37
    $region36: #{basemodel_forward.1} parent=1 // pred_region
      %88 = dma.done [#allocation3], 64
    $region37: #{basemodel_forward.1} parent=1 // pred_fallthru
      _
    // Predicated region
    $region38: #{basemodel_forward.1} parent=1 // pred_check
      _
    $region39: #{basemodel_forward.1} parent=1 // pred_check_branch
      %90 = sbr.rel (0) target = $region41
    $region40: #{basemodel_forward.1} parent=1 // pred_region
      %91 = dma.done [#allocation5], 16
    $region41: #{basemodel_forward.1} parent=1 // pred_fallthru
      _
    // Predicated region
    $region42: #{basemodel_forward.1} parent=1 // pred_check
      _
    $region43: #{basemodel_forward.1} parent=1 // pred_check_branch
      %93 = sbr.rel (0) target = $region45
    $region44: #{basemodel_forward.1} parent=1 // pred_region
      %94 = dma.done [#allocation5], 64
    $region45: #{basemodel_forward.1} parent=1 // pred_fallthru
      _
    // Predicated region
    $region46: #{basemodel_forward.1} parent=1 // pred_check
      _
    $region47: #{basemodel_forward.1} parent=1 // pred_check_branch
      %96 = sbr.rel (0) target = $region49
    $region48: #{basemodel_forward.1} parent=1 // pred_region
      %97 = dma.done [#allocation8], 16
    $region49: #{basemodel_forward.1} parent=1 // pred_fallthru
      _
    // Predicated region
    $region50: #{basemodel_forward.1} parent=1 // pred_check
      _
    $region51: #{basemodel_forward.1} parent=1 // pred_check_branch
      %99 = sbr.rel (0) target = $region53
    $region52: #{basemodel_forward.1} parent=1 // pred_region
      %100 = dma.done [#allocation8], 32
    $region53: #{basemodel_forward.1} parent=1 // pred_fallthru
      _
    // Predicated region
    $region54: #{basemodel_forward.1} parent=1 // pred_check
      _
    $region55: #{basemodel_forward.1} parent=1 // pred_check_branch
      %102 = sbr.rel (0) target = $region57
    $region56: #{basemodel_forward.1} parent=1 // pred_region
      %103 = dma.done [#allocation11], 16
    $region57: #{basemodel_forward.1} parent=1 // pred_fallthru
      _
    %104 = sfence
    %v105 = vld [vmem:[%s0] sm:$0xff]
    %s106 = scalar_lea.vmem %s0, 8
    %v107 = vld [vmem:[%s106] sm:$0xff]
    %s108 = scalar_lea.vmem %s0, 16
    %v109 = vld [vmem:[%s108] sm:$0xff]
    %s110 = scalar_lea.vmem %s0, 24
    %v111 = vld [vmem:[%s110] sm:$0xff]
    %s112 = sld [smem:[#allocation2]]
    %v113 = vstv %s112
    %v114 = vmul.f32 %v105, %v113
    %s115 = sld [smem:[#allocation6]]
    %v116 = vstv %s115
    %v117 = vmul.f32 %v105, %v116
    %s118 = sld [smem:[#allocation2 + $0x80]]
    %v119 = vstv %s118
    %v120 = vmul.f32 %v107, %v119
    %v121 = vadd.f32 %v114, %v120
    %s122 = sld [smem:[#allocation6 + $0x80]]
    %v123 = vstv %s122
    %v124 = vmul.f32 %v107, %v123
    %v125 = vadd.f32 %v117, %v124
    %s126 = sld [smem:[#allocation2 + $0x100]]
    %v127 = vstv %s126
    %v128 = vmul.f32 %v109, %v127
    %v129 = vadd.f32 %v121, %v128
    %s130 = sld [smem:[#allocation6 + $0x100]]
    %v131 = vstv %s130
    %v132 = vmul.f32 %v109, %v131
    %v133 = vadd.f32 %v125, %v132
    %s134 = sld [smem:[#allocation2 + $0x180]]
    %v135 = vstv %s134
    %v136 = vmul.f32 %v111, %v135
    %v137 = vadd.f32 %v129, %v136
    %s138 = sld [smem:[#allocation6 + $0x180]]
    %v139 = vstv %s138
    %v140 = vmul.f32 %v111, %v139
    %v141 = vadd.f32 %v133, %v140
    %s142 = sld [smem:[#allocation4]]
    %v143 = vstv %s142
    %v144 = vadd.f32 %v137, %v143
    %s145 = sld [smem:[#allocation7]]
    %v146 = vstv %s145
    %v147 = vadd.f32 %v141, %v146
    %v148 = vmax.f32 %v147, 0.0
    %vm149 = vcmp.ne.f32.partialorder %v147, %v147
    %v150 = vadd.f32 %v147, 0.0
    %v151 = vand.u32 2147483647, %v147
    %v152 = vsub.f32 0.0, %v151
    %v153 = vmul.f32 %v152, 1.442695
    %v154 = vpow.pop %v153
    %v155 = vadd.f32 %v154, 1.0
    %v156 = vlog2.pop %v155
    %v157 = vmul.f32 %v156, 0.6931472
    %v158 = vmul.f32 -0.5, %v154
    %v159 = vadd.f32 %v158, 1.0
    %v160 = vmul.f32 %v159, %v154
    %v161 = vand.u32 2147483647, %v154
    %vm162 = vcmp.lt.f32.partialorder %v161, 0.0004427343
    %v163 = vsel %vm162, %v160, %v157
    %v164 = vadd.f32 %v148, %v163
    %v165 = vsel %vm149, %v150, %v164
    %v166 = vrsqrt.pop %v165
    %v167 = vmul.f32 %v165, %v166
    %vm168 = vcmp.eq.f32.partialorder %v165, inf
    %v169 = vsel %vm168, %v165, %v167
    %vm170 = vcmp.eq.f32.partialorder %v165, 0.0
    %v171 = vand.u32 %v165, 2147483648
    %v172 = vsel %vm170, %v171, %v169
    %v173 = vadd.f32 %v172, 1e-05
    %v174 = vld [vmem:[%s1] sm:$0xff]
    %v175 = vmul.f32 %v173, %v174
    %v176 = vadd.f32 %v144, %v175
    %177 = vst [vmem:[%s10] sm:$0xff] %v144
    %178 = vst [vmem:[%s11] sm:$0xff] %v165
    %179 = vst [vmem:[%s9] sm:$0xff] %v176
    %v180 = vlog2.pop %v173
    %v181 = vmul.f32 %v180, 0.6931472
    %v182 = vsub.f32 0.0, %v181
    %v183 = vsub.f32 %v182, 0.9189385
    %v184 = vmul.f32 %v174, %v174
    %v185 = vmul.f32 %v184, 0.5
    %v186 = vsub.f32 %v183, %v185
    %v187 = vmul.f32 %v176, %v176
    %v188 = vmul.f32 %v187, 0.5
    %v189 = vsub.f32 -0.9189385, %v188
    %s190 = sld [smem:[#allocation2 + $0x1]]
    %v191 = vstv %s190
    %v192 = vmul.f32 %v105, %v191
    %s193 = sld [smem:[#allocation6 + $0x1]]
    %v194 = vstv %s193
    %v195 = vmul.f32 %v105, %v194
    %s196 = sld [smem:[#allocation2 + $0x81]]
    %v197 = vstv %s196
    %v198 = vmul.f32 %v107, %v197
    %v199 = vadd.f32 %v192, %v198
    %s200 = sld [smem:[#allocation6 + $0x81]]
    %v201 = vstv %s200
    %v202 = vmul.f32 %v107, %v201
    %v203 = vadd.f32 %v195, %v202
    %s204 = sld [smem:[#allocation2 + $0x101]]
    %v205 = vstv %s204
    %v206 = vmul.f32 %v109, %v205
    %v207 = vadd.f32 %v199, %v206
    %s208 = sld [smem:[#allocation6 + $0x101]]
    %v209 = vstv %s208
    %v210 = vmul.f32 %v109, %v209
    %v211 = vadd.f32 %v203, %v210
    %s212 = sld [smem:[#allocation2 + $0x181]]
    %v213 = vstv %s212
    %v214 = vmul.f32 %v111, %v213
    %v215 = vadd.f32 %v207, %v214
    %s216 = sld [smem:[#allocation6 + $0x181]]
    %v217 = vstv %s216
    %v218 = vmul.f32 %v111, %v217
    %v219 = vadd.f32 %v211, %v218
    %s220 = sld [smem:[#allocation4 + $0x1]]
    %v221 = vstv %s220
    %v222 = vadd.f32 %v215, %v221
    %s223 = sld [smem:[#allocation7 + $0x1]]
    %v224 = vstv %s223
    %v225 = vadd.f32 %v219, %v224
    %v226 = vmax.f32 %v225, 0.0
    %vm227 = vcmp.ne.f32.partialorder %v225, %v225
    %v228 = vadd.f32 %v225, 0.0
    %v229 = vand.u32 2147483647, %v225
    %v230 = vsub.f32 0.0, %v229
    %v231 = vmul.f32 %v230, 1.442695
    %v232 = vpow.pop %v231
    %v233 = vadd.f32 %v232, 1.0
    %v234 = vlog2.pop %v233
    %v235 = vmul.f32 %v234, 0.6931472
    %v236 = vmul.f32 -0.5, %v232
    %v237 = vadd.f32 %v236, 1.0
    %v238 = vmul.f32 %v237, %v232
    %v239 = vand.u32 2147483647, %v232
    %vm240 = vcmp.lt.f32.partialorder %v239, 0.0004427343
    %v241 = vsel %vm240, %v238, %v235
    %v242 = vadd.f32 %v226, %v241
    %v243 = vsel %vm227, %v228, %v242
    %v244 = vrsqrt.pop %v243
    %v245 = vmul.f32 %v243, %v244
    %vm246 = vcmp.eq.f32.partialorder %v243, inf
    %v247 = vsel %vm246, %v243, %v245
    %vm248 = vcmp.eq.f32.partialorder %v243, 0.0
    %v249 = vand.u32 %v243, 2147483648
    %v250 = vsel %vm248, %v249, %v247
    %v251 = vadd.f32 %v250, 1e-05
    %s252 = scalar_lea.vmem %s1, 8
    %v253 = vld [vmem:[%s252] sm:$0xff]
    %v254 = vmul.f32 %v251, %v253
    %v255 = vadd.f32 %v222, %v254
    %s256 = scalar_lea.vmem %s10, 8
    %257 = vst [vmem:[%s256] sm:$0xff] %v222
    %s258 = scalar_lea.vmem %s11, 8
    %259 = vst [vmem:[%s258] sm:$0xff] %v243
    %s260 = scalar_lea.vmem %s9, 8
    %261 = vst [vmem:[%s260] sm:$0xff] %v255
    %v262 = vlog2.pop %v251
    %v263 = vmul.f32 %v262, 0.6931472
    %v264 = vsub.f32 %v186, %v263
    %v265 = vsub.f32 %v264, 0.9189385
    %v266 = vmul.f32 %v253, %v253
    %v267 = vmul.f32 %v266, 0.5
    %v268 = vsub.f32 %v265, %v267
    %v269 = vsub.f32 %v189, 0.9189385
    %v270 = vmul.f32 %v255, %v255
    %v271 = vmul.f32 %v270, 0.5
    %v272 = vsub.f32 %v269, %v271
    %v273 = vsub.f32 %v268, %v272
    %s274 = sld [smem:[#allocation9]]
    %v275 = vstv %s274
    %v276 = vmul.f32 %v176, %v275
    %s277 = sld [smem:[#allocation9 + $0x80]]
    %v278 = vstv %s277
    %v279 = vmul.f32 %v255, %v278
    %v280 = vadd.f32 %v276, %v279
    %s281 = sld [smem:[#allocation10]]
    %v282 = vstv %s281
    %v283 = vadd.f32 %v280, %v282
    %284 = vst [vmem:[%s8] sm:$0xff] %v283
    %v285 = vsub.f32 %v105, %v283
    %v286 = vmul.f32 %v285, 0.15
    %v287 = vmul.f32 %v285, -0.85
    %v288 = vmax.f32 %v286, %v287
    %v289 = vadd.f32 %v288, 0.0
    %s290 = sld [smem:[#allocation9 + $0x1]]
    %v291 = vstv %s290
    %v292 = vmul.f32 %v176, %v291
    %s293 = sld [smem:[#allocation9 + $0x81]]
    %v294 = vstv %s293
    %v295 = vmul.f32 %v255, %v294
    %v296 = vadd.f32 %v292, %v295
    %s297 = sld [smem:[#allocation10 + $0x1]]
    %v298 = vstv %s297
    %v299 = vadd.f32 %v296, %v298
    %s300 = scalar_lea.vmem %s8, 8
    %301 = vst [vmem:[%s300] sm:$0xff] %v299
    %v302 = vsub.f32 %v107, %v299
    %v303 = vmul.f32 %v302, 0.15
    %v304 = vmul.f32 %v302, -0.85
    %v305 = vmax.f32 %v303, %v304
    %v306 = vadd.f32 %v289, %v305
    %s307 = sld [smem:[#allocation9 + $0x2]]
    %v308 = vstv %s307
    %v309 = vmul.f32 %v176, %v308
    %s310 = sld [smem:[#allocation9 + $0x82]]
    %v311 = vstv %s310
    %v312 = vmul.f32 %v255, %v311
    %v313 = vadd.f32 %v309, %v312
    %s314 = sld [smem:[#allocation10 + $0x2]]
    %v315 = vstv %s314
    %v316 = vadd.f32 %v313, %v315
    %s317 = scalar_lea.vmem %s8, 16
    %318 = vst [vmem:[%s317] sm:$0xff] %v316
    %v319 = vsub.f32 %v109, %v316
    %v320 = vmul.f32 %v319, 0.15
    %v321 = vmul.f32 %v319, -0.85
    %v322 = vmax.f32 %v320, %v321
    %v323 = vadd.f32 %v306, %v322
    %s324 = sld [smem:[#allocation9 + $0x3]]
    %v325 = vstv %s324
    %v326 = vmul.f32 %v176, %v325
    %s327 = sld [smem:[#allocation9 + $0x83]]
    %v328 = vstv %s327
    %v329 = vmul.f32 %v255, %v328
    %v330 = vadd.f32 %v326, %v329
    %s331 = sld [smem:[#allocation10 + $0x3]]
    %v332 = vstv %s331
    %v333 = vadd.f32 %v330, %v332
    %s334 = scalar_lea.vmem %s8, 24
    %335 = vst [vmem:[%s334] sm:$0xff] %v333
    %v336 = vsub.f32 %v111, %v333
    %v337 = vmul.f32 %v336, 0.15
    %v338 = vmul.f32 %v336, -0.85
    %v339 = vmax.f32 %v337, %v338
    %v340 = vadd.f32 %v323, %v339
    %s341 = sld [smem:[#allocation9 + $0x4]]
    %v342 = vstv %s341
    %v343 = vmul.f32 %v176, %v342
    %s344 = sld [smem:[#allocation9 + $0x84]]
    %v345 = vstv %s344
    %v346 = vmul.f32 %v255, %v345
    %v347 = vadd.f32 %v343, %v346
    %s348 = sld [smem:[#allocation10 + $0x4]]
    %v349 = vstv %s348
    %v350 = vadd.f32 %v347, %v349
    %s351 = scalar_lea.vmem %s8, 32
    %352 = vst [vmem:[%s351] sm:$0xff] %v350
    %v353 = vsub.f32 %v105, %v350
    %v354 = vmul.f32 %v353, 0.5
    %v355 = vmul.f32 %v353, -0.5
    %v356 = vmax.f32 %v354, %v355
    %v357 = vadd.f32 %v356, 0.0
    %s358 = sld [smem:[#allocation9 + $0x5]]
    %v359 = vstv %s358
    %v360 = vmul.f32 %v176, %v359
    %s361 = sld [smem:[#allocation9 + $0x85]]
    %v362 = vstv %s361
    %v363 = vmul.f32 %v255, %v362
    %v364 = vadd.f32 %v360, %v363
    %s365 = sld [smem:[#allocation10 + $0x5]]
    %v366 = vstv %s365
    %v367 = vadd.f32 %v364, %v366
    %s368 = scalar_lea.vmem %s8, 40
    %369 = vst [vmem:[%s368] sm:$0xff] %v367
    %v370 = vsub.f32 %v107, %v367
    %v371 = vmul.f32 %v370, 0.5
    %v372 = vmul.f32 %v370, -0.5
    %v373 = vmax.f32 %v371, %v372
    %v374 = vadd.f32 %v357, %v373
    %s375 = sld [smem:[#allocation9 + $0x6]]
    %v376 = vstv %s375
    %v377 = vmul.f32 %v176, %v376
    %s378 = sld [smem:[#allocation9 + $0x86]]
    %v379 = vstv %s378
    %v380 = vmul.f32 %v255, %v379
    %v381 = vadd.f32 %v377, %v380
    %s382 = sld [smem:[#allocation10 + $0x6]]
    %v383 = vstv %s382
    %v384 = vadd.f32 %v381, %v383
    %s385 = scalar_lea.vmem %s8, 48
    %386 = vst [vmem:[%s385] sm:$0xff] %v384
    %v387 = vsub.f32 %v109, %v384
    %v388 = vmul.f32 %v387, 0.5
    %v389 = vmul.f32 %v387, -0.5
    %v390 = vmax.f32 %v388, %v389
    %v391 = vadd.f32 %v374, %v390
    %s392 = sld [smem:[#allocation9 + $0x7]]
    %v393 = vstv %s392
    %v394 = vmul.f32 %v176, %v393
    %s395 = sld [smem:[#allocation9 + $0x87]]
    %v396 = vstv %s395
    %v397 = vmul.f32 %v255, %v396
    %v398 = vadd.f32 %v394, %v397
    %s399 = sld [smem:[#allocation10 + $0x7]]
    %v400 = vstv %s399
    %v401 = vadd.f32 %v398, %v400
    %s402 = scalar_lea.vmem %s8, 56
    %403 = vst [vmem:[%s402] sm:$0xff] %v401
    %v404 = vsub.f32 %v111, %v401
    %v405 = vmul.f32 %v404, 0.5
    %v406 = vmul.f32 %v404, -0.5
    %v407 = vmax.f32 %v405, %v406
    %v408 = vadd.f32 %v391, %v407
    %v409 = vadd.f32 %v340, %v408
    %v410 = vmul.f32 %v409, 0.5
    %v411 = vsub.f32 0.0, %v410
    %v412 = vmul.f32 %v273, 0.28
    %v413 = vsub.f32 %v411, %v412
    %v414 = vlaneseq
    %v415 = vshrl.u32 %v414, 7
    %v416 = vlaneseq
    %v417 = vand.u32 %v416, 127
    %s418 = smul.u32 0, 8
    %v419 = vstv %s418
    %v420 = vadd.s32 %v419, %v415
    %v421 = vmul.u32 %v420, 128
    %v422 = vadd.s32 %v421, %v417
    %vm423 = vcmp.lt.s32.totalorder %v422, 8
    %v424 = vsel %vm423, %v410, 0.0
    %425 = vadd.xlane.f32.xlu0 %v424
    %v426 = vpop.xlane.xlu0 %425
    %v427 = vrot.slane %v426, 4
    %v428 = vadd.f32 %v426, %v427
    %v429 = vrot.slane %v428, 2
    %v430 = vadd.f32 %v428, %v429
    %v431 = vrot.slane %v430, 1
    %v432 = vadd.f32 %v430, %v431
    %s433 = vtos %v432
    %v434 = vsel %vm423, %v273, 0.0
    %435 = vadd.xlane.f32.xlu0 %v434
    %v436 = vpop.xlane.xlu0 %435
    %v437 = vrot.slane %v436, 4
    %v438 = vadd.f32 %v436, %v437
    %v439 = vrot.slane %v438, 2
    %v440 = vadd.f32 %v438, %v439
    %v441 = vrot.slane %v440, 1
    %v442 = vadd.f32 %v440, %v441
    %s443 = vtos %v442
    %v444 = vsel %vm423, %v413, 0.0
    %445 = vadd.xlane.f32.xlu0 %v444
    %v446 = vpop.xlane.xlu0 %445
    %v447 = vrot.slane %v446, 4
    %v448 = vadd.f32 %v446, %v447
    %v449 = vrot.slane %v448, 2
    %v450 = vadd.f32 %v448, %v449
    %v451 = vrot.slane %v450, 1
    %v452 = vadd.f32 %v450, %v451
    %s453 = vtos %v452
    %vm454 = vcmp.eq.s32.totalorder %v415, 0
    %vm455 = vcmp.eq.s32.totalorder %v415, 1
    %vm456 = vcmp.eq.s32.totalorder %v415, 2
    %v457 = vstv %s453
    %v458 = vsel %vm456, %v457, 0.0
    %v459 = vstv %s443
    %v460 = vsel %vm455, %v459, %v458
    %v461 = vstv %s433
    %v462 = vsel %vm454, %v461, %v460
    %463 = vst [vmem:[%s12] sm:$0xff] %v462
    // Predicated region
    $region58: #{basemodel_forward.1} parent=1 // pred_check
      _
    $region59: #{basemodel_forward.1} parent=1 // pred_check_branch
      %465 = sbr.rel (0) target = $region61
    $region60: #{basemodel_forward.1} parent=1 // pred_region
      _
    $region61: #{basemodel_forward.1} parent=1 // pred_fallthru
      _
    // Predicated region
    $region62: #{basemodel_forward.1} parent=1 // pred_check
      _
    $region63: #{basemodel_forward.1} parent=1 // pred_check_branch
      %467 = sbr.rel (0) target = $region65
    $region64: #{basemodel_forward.1} parent=1 // pred_region
      _
    $region65: #{basemodel_forward.1} parent=1 // pred_fallthru
      _
    // Predicated region
    $region66: #{basemodel_forward.1} parent=1 // pred_check
      _
    $region67: #{basemodel_forward.1} parent=1 // pred_check_branch
      %469 = sbr.rel (0) target = $region69
    $region68: #{basemodel_forward.1} parent=1 // pred_region
      _
    $region69: #{basemodel_forward.1} parent=1 // pred_fallthru
      _
    // Predicated region
    $region70: #{basemodel_forward.1} parent=1 // pred_check
      _
    $region71: #{basemodel_forward.1} parent=1 // pred_check_branch
      %471 = sbr.rel (0) target = $region73
    $region72: #{basemodel_forward.1} parent=1 // pred_region
      _
    $region73: #{basemodel_forward.1} parent=1 // pred_fallthru
      _
    // Predicated region
    $region74: #{basemodel_forward.1} parent=1 // pred_check
      _
    $region75: #{basemodel_forward.1} parent=1 // pred_check_branch
      %473 = sbr.rel (0) target = $region77
    $region76: #{basemodel_forward.1} parent=1 // pred_region
      _
    $region77: #{basemodel_forward.1} parent=1 // pred_fallthru
      _
    // Predicated region
    $region78: #{basemodel_forward.1} parent=1 // pred_check
      _
    $region79: #{basemodel_forward.1} parent=1 // pred_check_branch
      %475 = sbr.rel (0) target = $region81
    $region80: #{basemodel_forward.1} parent=1 // pred_region
      _
    $region81: #{basemodel_forward.1} parent=1 // pred_fallthru
      _
    // Predicated region
    $region82: #{basemodel_forward.1} parent=1 // pred_check
      _
    $region83: #{basemodel_forward.1} parent=1 // pred_check_branch
      %477 = sbr.rel (0) target = $region85
    $region84: #{basemodel_forward.1} parent=1 // pred_region
      _
    $region85: #{basemodel_forward.1} parent=1 // pred_fallthru
      _
    // Predicated region
    $region86: #{basemodel_forward.1} parent=1 // pred_check
      _
    $region87: #{basemodel_forward.1} parent=1 // pred_check_branch
      %479 = sbr.rel (0) target = $region89
    $region88: #{basemodel_forward.1} parent=1 // pred_region
      _
    $region89: #{basemodel_forward.1} parent=1 // pred_fallthru
      _
    // Predicated region
    $region90: #{basemodel_forward.1} parent=1 // pred_check
      _
    $region91: #{basemodel_forward.1} parent=1 // pred_check_branch
      %481 = sbr.rel (0) target = $region93
    $region92: #{basemodel_forward.1} parent=1 // pred_region
      _
    $region93: #{basemodel_forward.1} parent=1 // pred_fallthru
      _
    // Predicated region
    $region94: #{basemodel_forward.1} parent=1 // pred_check
      _
    $region95: #{basemodel_forward.1} parent=1 // pred_check_branch
      %483 = sbr.rel (0) target = $region97
    $region96: #{basemodel_forward.1} parent=1 // pred_region
      _
    $region97: #{basemodel_forward.1} parent=1 // pred_fallthru
      _
    %484 = vsyncpa [#allocation3], 1
    %485 = vsyncpa [#allocation5], 1
    %486 = vsyncpa [#allocation8], 1
    %487 = vsyncpa [#allocation11], 1

</llo_original>
